<compile_context>
chip_gen: v5e
topology: v5e:2x2
jax: 0.10.0
libtpu: 0.0.40
codegen_flags: <defaults>
</compile_context>

<pallas_src>
import functools

import jax
import jax.numpy as jnp
from jax.experimental import pallas as pl
from jax.experimental.pallas import tpu as pltpu

_EPS = 1e-10
_LANES = 128
_ACC_ROWS = 8                      # one f32 vreg worth of partial accumulators
_DEFAULT_TILE_ROWS = 2048          # (2048, 128) f32 = 1 MiB per tile (was 512)
_FUSED_MAX_ELEMS = 512 * 1024      # <= 2 MiB f32 slab -> single fused call
_VMEM_LIMIT = 32 * 1024 * 1024     # explicit (v5e scoped default is only 16 MiB)


def _round_up(a, b):
    return ((a + b - 1) // b) * b


def _fold_rows(a):
    """(tile_rows, 128) -> (8, 128) partial sums (pure VALU adds across vregs)."""
    tr, c = a.shape
    return jnp.sum(a.reshape(tr // _ACC_ROWS, _ACC_ROWS, c), axis=0)


def _valid_mask(shape, row0, full_rows, rem):
    """Element-validity mask for a tile whose first global row is `row0`."""
    ridx = jax.lax.broadcasted_iota(jnp.int32, shape, 0) + row0
    valid = ridx < full_rows
    if rem > 0:
        cidx = jax.lax.broadcasted_iota(jnp.int32, shape, 1)
        valid = valid | ((ridx == full_rows) & (cidx < rem))
    return valid


# --------------------------------------------------------------------------
# Fused fast path: whole slab resident in VMEM, single kernel invocation.
# --------------------------------------------------------------------------
def _fused_kernel(p_ref, x_ref, o_ref, *, n, full_rows, rem):
    x = x_ref[...].astype(jnp.float32)
    gamma = p_ref[0]
    beta = p_ref[1]
    thres = p_ref[2]
    nf = jnp.float32(n)

    if rem > 0:                                   # static decision
        valid = _valid_mask(x.shape, 0, full_rows, rem)
        msum = lambda v: jnp.sum(jnp.where(valid, v, 0.0))
    else:
        valid = None
        msum = jnp.sum

    # Exact two-pass mean/var over all elements (no cancellation).
    mean1 = msum(x) / nf
    xc = x - mean1
    var1 = msum(xc * xc) / (nf - 1.0)
    radius = thres * jnp.sqrt(var1 + _EPS)        # |normalized| < thres

    sel = jnp.abs(xc) < radius
    if valid is not None:
        sel = sel & valid
    cnt = jnp.sum(sel.astype(jnp.float32))
    s2 = jnp.sum(jnp.where(sel, xc, 0.0))
    d = xc - s2 / cnt                             # = x - mean2
    var2 = jnp.sum(jnp.where(sel, d * d, 0.0)) / (cnt - 1.0)

    scale = gamma * jax.lax.rsqrt(var2 + _EPS)
    o_ref[...] = (d * scale + beta).astype(o_ref.dtype)


# --------------------------------------------------------------------------
# Streaming pass 1: per-lane partial sums of (x - pivot) and (x - pivot)^2.
# Grid is (2, half): leading axis "parallel" (one half of the tiles per
# TensorCore on v7x), each core owns its own accumulator block row.
# --------------------------------------------------------------------------
def _sums_kernel(p_ref, x_ref, sum_ref, sq_ref, *, tr, half, full_rows, rem,
                 data_rows):
    i = pl.program_id(1)
    t = pl.program_id(0) * half + i               # global tile index

    @pl.when(i == 0)
    def _init():
        sum_ref[...] = jnp.zeros_like(sum_ref)
        sq_ref[...] = jnp.zeros_like(sq_ref)

    x = x_ref[...].astype(jnp.float32)
    xp = x - p_ref[0]                             # pivot for numerical stability
    row0 = t * tr

    def _acc(v):
        sum_ref[...] += _fold_rows(v)
        sq_ref[...] += _fold_rows(v * v)

    @pl.when(row0 + tr <= full_rows)              # fully valid tile: no mask
    def _full():
        _acc(xp)

    @pl.when((row0 < data_rows) & (row0 + tr > full_rows))   # tail tile only
    def _tail():
        _acc(jnp.where(_valid_mask(x.shape, row0, full_rows, rem), xp, 0.0))
    # t beyond the last real tile (clamped duplicate of the 2-core split): no-op.


# --------------------------------------------------------------------------
# Streaming pass 2: filtered partial sums, pivoted at mean1.
#   selected  <=>  |x - mean1| < radius   (equivalent to |normalized| < thres)
# --------------------------------------------------------------------------
def _filtered_sums_kernel(p_ref, x_ref, sum_ref, sq_ref, cnt_ref, *, tr, half,
                          full_rows, rem, data_rows):
    i = pl.program_id(1)
    t = pl.program_id(0) * half + i

    @pl.when(i == 0)
    def _init():
        sum_ref[...] = jnp.zeros_like(sum_ref)
        sq_ref[...] = jnp.zeros_like(sq_ref)
        cnt_ref[...] = jnp.zeros_like(cnt_ref)

    x = x_ref[...].astype(jnp.float32)
    xc = x - p_ref[0]                             # mean1
    sel = jnp.abs(xc) < p_ref[1]                  # radius = thres * std1
    row0 = t * tr

    def _acc(s):
        d = jnp.where(s, xc, 0.0)
        sum_ref[...] += _fold_rows(d)
        sq_ref[...] += _fold_rows(d * d)
        cnt_ref[...] += _fold_rows(s.astype(jnp.float32))

    @pl.when(row0 + tr <= full_rows)
    def _full():
        _acc(sel)

    @pl.when((row0 < data_rows) & (row0 + tr > full_rows))
    def _tail():
        _acc(sel & _valid_mask(x.shape, row0, full_rows, rem))


# --------------------------------------------------------------------------
# Streaming pass 3: element-wise affine normalization of the ORIGINAL values.
# --------------------------------------------------------------------------
def _normalize_kernel(p_ref, x_ref, o_ref):
    x = x_ref[...].astype(jnp.float32)
    # p = [mean2, gamma * rsqrt(var2 + eps), beta]
    o_ref[...] = ((x - p_ref[0]) * p_ref[1] + p_ref[2]).astype(o_ref.dtype)


# --------------------------------------------------------------------------
# Wrapper
# --------------------------------------------------------------------------
def bn1d_filtered(xorig, gamma, beta, thres=4.0, tile_rows=_DEFAULT_TILE_ROWS,
                  force_streaming=False):
    """Pallas implementation of BN1dFitlered.forward. Returns xorig's shape."""
    orig_shape = xorig.shape
    orig_dtype = xorig.dtype

    x = xorig.reshape(-1)
    if x.dtype not in (jnp.float32, jnp.bfloat16, jnp.float16):
        x = x.astype(jnp.float32)              # ints / exotic dtypes: compute in f32
    granule = 8 if x.dtype.itemsize == 4 else 16

    n = x.shape[0]
    full_rows, rem = divmod(n, _LANES)         # complete rows / partial-row lanes
    padded_n = _round_up(n, _LANES)            # pad only to a lane multiple
    if padded_n != n:
        # TODO(synk): a 1-D BlockSpec + in-kernel reshape would avoid this pad
        # copy for lane-misaligned n; kept the (<=127-element) pad for robustness.
        x = jnp.pad(x, (0, padded_n - n))
    total_rows = padded_n // _LANES
    x2d = x.reshape(total_rows, _LANES)        # free reshape, no copy

    gamma_f = jnp.asarray(gamma, jnp.float32)
    beta_f = jnp.asarray(beta, jnp.float32)
    thres_f = jnp.asarray(thres, jnp.float32)

    smem_spec = pl.BlockSpec(memory_space=pltpu.MemorySpace.SMEM)

    use_fused = (padded_n <= _FUSED_MAX_ELEMS) and not force_streaming
    if use_fused:
        # ---- single VMEM-resident kernel: 1 HBM read + 1 HBM write ----
        out2d = pl.pallas_call(
            functools.partial(_fused_kernel, n=n, full_rows=full_rows, rem=rem),
            in_specs=[smem_spec,
                      pl.BlockSpec(memory_space=pltpu.MemorySpace.VMEM)],
            out_specs=pl.BlockSpec(memory_space=pltpu.MemorySpace.VMEM),
            out_shape=jax.ShapeDtypeStruct((total_rows, _LANES), x2d.dtype),
            compiler_params=pltpu.CompilerParams(vmem_limit_bytes=_VMEM_LIMIT),
        )(jnp.stack([gamma_f, beta_f, thres_f]), x2d)
    else:
        # ---- streaming path: 3 gridded passes (3 reads + 1 write of HBM) ----
        tr = min(_round_up(tile_rows, granule), _round_up(total_rows, granule))
        num_tiles = pl.cdiv(total_rows, tr)    # last tile may be partial (masked)
        half = pl.cdiv(num_tiles, 2)           # tiles per TensorCore (v7x: 2 TCs)

        # Clamp so the duplicated slot of the 2-way split never DMAs OOB; the
        # kernel skips accumulation for it (row0 >= data_rows).
        x_spec = pl.BlockSpec(
            (tr, _LANES),
            lambda c, i: (jnp.minimum(c * half + i, num_tiles - 1), 0))
        acc_shape = jax.ShapeDtypeStruct((2 * _ACC_ROWS, _LANES), jnp.float32)
        acc_spec = pl.BlockSpec((_ACC_ROWS, _LANES), lambda c, i: (c, 0))
        reduce_params = pltpu.CompilerParams(
            dimension_semantics=("parallel", "arbitrary"),
            vmem_limit_bytes=_VMEM_LIMIT)
        statics = dict(tr=tr, half=half, full_rows=full_rows, rem=rem,
                       data_rows=total_rows)

        nf = jnp.float32(n)
        pivot = x2d[0, 0].astype(jnp.float32).reshape(1)

        # pass 1: sums of (x - pivot), (x - pivot)^2
        sum1_acc, sq1_acc = pl.pallas_call(
            functools.partial(_sums_kernel, **statics),
            grid=(2, half),
            in_specs=[smem_spec, x_spec],
            out_specs=(acc_spec, acc_spec),
            out_shape=(acc_shape, acc_shape),
            compiler_params=reduce_params,
        )(pivot, x2d)

        s1 = jnp.sum(sum1_acc)
        mean1 = pivot[0] + s1 / nf
        var1 = (jnp.sum(sq1_acc) - s1 * s1 / nf) / (nf - 1.0)
        radius = thres_f * jnp.sqrt(var1 + _EPS)

        # pass 2: filtered sums, pivoted at mean1
        sum2_acc, sq2_acc, cnt_acc = pl.pallas_call(
            functools.partial(_filtered_sums_kernel, **statics),
            grid=(2, half),
            in_specs=[smem_spec, x_spec],
            out_specs=(acc_spec, acc_spec, acc_spec),
            out_shape=(acc_shape, acc_shape, acc_shape),
            compiler_params=reduce_params,
        )(jnp.stack([mean1, radius]), x2d)

        cnt = jnp.sum(cnt_acc)                 # no cnt<=1 guard: matches PyTorch ref
        s2 = jnp.sum(sum2_acc)
        mean2 = mean1 + s2 / cnt
        var2 = (jnp.sum(sq2_acc) - s2 * s2 / cnt) / (cnt - 1.0)
        scale = gamma_f * jax.lax.rsqrt(var2 + _EPS)

        # pass 3: element-wise normalize + write (parallel across TCs)
        out2d = pl.pallas_call(
            _normalize_kernel,
            grid=(num_tiles,),
            in_specs=[smem_spec, pl.BlockSpec((tr, _LANES), lambda i: (i, 0))],
            out_specs=pl.BlockSpec((tr, _LANES), lambda i: (i, 0)),
            out_shape=jax.ShapeDtypeStruct((total_rows, _LANES), x2d.dtype),
            compiler_params=pltpu.CompilerParams(
                dimension_semantics=("parallel",),
                vmem_limit_bytes=_VMEM_LIMIT),
        )(jnp.stack([mean2, scale, beta_f]), x2d)

    out = out2d.reshape(-1)
    if padded_n != n:
        out = out[:n]
    return out.reshape(orig_shape).astype(orig_dtype)


def _reference(xorig, gamma, beta, thres):
    # Pure-JAX reference mirroring the PyTorch module (unbiased variance).
    x = xorig.reshape(-1).astype(jnp.float32)
    n = x.shape[0]
    mean1 = jnp.mean(x)
    var1 = jnp.sum((x - mean1) ** 2) / (n - 1)
    normalized = (x - mean1) / jnp.sqrt(var1 + _EPS)
    sel = (normalized < thres) & (normalized > -thres)
    cnt = jnp.sum(sel.astype(jnp.float32))
    mean2 = jnp.sum(jnp.where(sel, x, 0.0)) / cnt
    var2 = jnp.sum(jnp.where(sel, (x - mean2) ** 2, 0.0)) / (cnt - 1.0)
    return gamma * (xorig - mean2) / jnp.sqrt(var2 + _EPS) + beta


if __name__ == "__main__":
    key = jax.random.PRNGKey(0)
    # NCHW input, like a conv activation: batch=2, channels=4, spatial=16x16
    x = jax.random.normal(key, (2, 4, 16, 16), dtype=jnp.float32) * 3.0

    # Deterministic parameter init per the module's __init__:
    gamma = jnp.float32(1.0)
    beta = jnp.float32(0.0)
    thres = 4.0

    ref = _reference(x, gamma, beta, thres)

    # Fused VMEM-resident path (default for small/medium inputs).
    fused_fn = jax.jit(bn1d_filtered)
    out = jax.block_until_ready(fused_fn(x, gamma, beta))
    assert out.shape == x.shape and out.dtype == x.dtype
    assert jnp.allclose(out, ref, atol=1e-4, rtol=1e-4), (
        f"fused max err {jnp.max(jnp.abs(out - ref))}")

    # Streaming multi-tile path, forced with tiny tiles so the two-core grid,
    # accumulators and tail handling are exercised on the same small input.
    stream_fn = jax.jit(functools.partial(bn1d_filtered, tile_rows=8,
                                          force_streaming=True))
    out_s = jax.block_until_ready(stream_fn(x, gamma, beta))
    assert jnp.allclose(out_s, ref, atol=1e-4, rtol=1e-4), (
        f"stream max err {jnp.max(jnp.abs(out_s - ref))}")

    # Lane-misaligned element count (exercises the masked tail in both paths).
    x_odd = (jax.random.normal(jax.random.PRNGKey(1), (3, 5, 7),
                               dtype=jnp.float32) * 2.0 + 1.5)
    ref_odd = _reference(x_odd, gamma, beta, thres)
    out_odd = jax.block_until_ready(fused_fn(x_odd, gamma, beta))
    assert jnp.allclose(out_odd, ref_odd, atol=1e-4, rtol=1e-4), (
        f"odd fused max err {jnp.max(jnp.abs(out_odd - ref_odd))}")
    out_odd_s = jax.block_until_ready(stream_fn(x_odd, gamma, beta))
    assert jnp.allclose(out_odd_s, ref_odd, atol=1e-4, rtol=1e-4), (
        f"odd stream max err {jnp.max(jnp.abs(out_odd_s - ref_odd))}")

    print("KERNEL_OK")
</pallas_src>

<mosaic_0001>
module attributes {stable_mosaic.version = 11 : i64} {
  func.func @_fused_kernel(%arg0: memref<3xf32, #tpu.memory_space<smem>>, %arg1: memref<16x128xf32, #tpu.memory_space<vmem>>, %arg2: memref<16x128xf32, #tpu.memory_space<vmem>>) attributes {dimension_semantics = [], scalar_prefetch = 0 : i64, scratch_operands = 0 : i64, tpu.core_type = #tpu.core_type<tc>} {
    %c0 = arith.constant 0 : index
    %c0_0 = arith.constant 0 : index
    %0 = vector.load %arg1[%c0, %c0_0] : memref<16x128xf32, #tpu.memory_space<vmem>>, vector<16x128xf32>
    %c0_1 = arith.constant 0 : index
    %1 = memref.load %arg0[%c0_1] : memref<3xf32, #tpu.memory_space<smem>>
    %c1 = arith.constant 1 : index
    %2 = memref.load %arg0[%c1] : memref<3xf32, #tpu.memory_space<smem>>
    %c2 = arith.constant 2 : index
    %3 = memref.load %arg0[%c2] : memref<3xf32, #tpu.memory_space<smem>>
    %4 = vector.shape_cast %0 : vector<16x128xf32> to vector<1x16x128xf32>
    %cst = arith.constant dense<0.000000e+00> : vector<1xf32>
    %5 = vector.multi_reduction <add>, %4, %cst [1, 2] : vector<1x16x128xf32> to vector<1xf32>
    %6 = vector.shape_cast %5 : vector<1xf32> to vector<1x1x1xf32>
    %7 = vector.extract %6[0, 0, 0] : f32 from vector<1x1x1xf32>
    %cst_2 = arith.constant 2.048000e+03 : f32
    %8 = arith.divf %7, %cst_2 : f32
    %9 = vector.broadcast %8 : f32 to vector<16x128xf32>
    %10 = arith.subf %0, %9 : vector<16x128xf32>
    %11 = arith.mulf %10, %10 : vector<16x128xf32>
    %12 = vector.shape_cast %11 : vector<16x128xf32> to vector<1x16x128xf32>
    %cst_3 = arith.constant dense<0.000000e+00> : vector<1xf32>
    %13 = vector.multi_reduction <add>, %12, %cst_3 [1, 2] : vector<1x16x128xf32> to vector<1xf32>
    %14 = vector.shape_cast %13 : vector<1xf32> to vector<1x1x1xf32>
    %15 = vector.extract %14[0, 0, 0] : f32 from vector<1x1x1xf32>
    %cst_4 = arith.constant 2.048000e+03 : f32
    %cst_5 = arith.constant 1.000000e+00 : f32
    %16 = arith.subf %cst_4, %cst_5 : f32
    %17 = arith.divf %15, %16 : f32
    %cst_6 = arith.constant 1.000000e-10 : f32
    %18 = arith.addf %17, %cst_6 : f32
    %19 = math.sqrt %18 : f32
    %20 = arith.mulf %3, %19 : f32
    %21 = math.absf %10 : vector<16x128xf32>
    %22 = vector.broadcast %20 : f32 to vector<16x128xf32>
    %23 = arith.cmpf olt, %21, %22 : vector<16x128xf32>
    %24 = arith.extui %23 : vector<16x128xi1> to vector<16x128xi32>
    %25 = arith.sitofp %24 : vector<16x128xi32> to vector<16x128xf32>
    %26 = vector.shape_cast %25 : vector<16x128xf32> to vector<1x16x128xf32>
    %cst_7 = arith.constant dense<0.000000e+00> : vector<1xf32>
    %27 = vector.multi_reduction <add>, %26, %cst_7 [1, 2] : vector<1x16x128xf32> to vector<1xf32>
    %28 = vector.shape_cast %27 : vector<1xf32> to vector<1x1x1xf32>
    %29 = vector.extract %28[0, 0, 0] : f32 from vector<1x1x1xf32>
    %cst_8 = arith.constant 0.000000e+00 : f32
    %30 = vector.broadcast %cst_8 : f32 to vector<16x128xf32>
    %31 = arith.select %23, %10, %30 : vector<16x128xi1>, vector<16x128xf32>
    %32 = vector.shape_cast %31 : vector<16x128xf32> to vector<1x16x128xf32>
    %cst_9 = arith.constant dense<0.000000e+00> : vector<1xf32>
    %33 = vector.multi_reduction <add>, %32, %cst_9 [1, 2] : vector<1x16x128xf32> to vector<1xf32>
    %34 = vector.shape_cast %33 : vector<1xf32> to vector<1x1x1xf32>
    %35 = vector.extract %34[0, 0, 0] : f32 from vector<1x1x1xf32>
    %36 = arith.divf %35, %29 : f32
    %37 = vector.broadcast %36 : f32 to vector<16x128xf32>
    %38 = arith.subf %10, %37 : vector<16x128xf32>
    %39 = arith.mulf %38, %38 : vector<16x128xf32>
    %cst_10 = arith.constant 0.000000e+00 : f32
    %40 = vector.broadcast %cst_10 : f32 to vector<16x128xf32>
    %41 = arith.select %23, %39, %40 : vector<16x128xi1>, vector<16x128xf32>
    %42 = vector.shape_cast %41 : vector<16x128xf32> to vector<1x16x128xf32>
    %cst_11 = arith.constant dense<0.000000e+00> : vector<1xf32>
    %43 = vector.multi_reduction <add>, %42, %cst_11 [1, 2] : vector<1x16x128xf32> to vector<1xf32>
    %44 = vector.shape_cast %43 : vector<1xf32> to vector<1x1x1xf32>
    %45 = vector.extract %44[0, 0, 0] : f32 from vector<1x1x1xf32>
    %cst_12 = arith.constant 1.000000e+00 : f32
    %46 = arith.subf %29, %cst_12 : f32
    %47 = arith.divf %45, %46 : f32
    %cst_13 = arith.constant 1.000000e-10 : f32
    %48 = arith.addf %47, %cst_13 : f32
    %49 = math.rsqrt %48 : f32
    %50 = arith.mulf %1, %49 : f32
    %51 = vector.broadcast %50 : f32 to vector<16x128xf32>
    %52 = arith.mulf %38, %51 : vector<16x128xf32>
    %53 = vector.broadcast %2 : f32 to vector<16x128xf32>
    %54 = arith.addf %52, %53 : vector<16x128xf32>
    %c0_14 = arith.constant 0 : index
    %c0_15 = arith.constant 0 : index
    %55 = vector.load %arg2[%c0_14, %c0_15] : memref<16x128xf32, #tpu.memory_space<vmem>>, vector<16x128xf32>
    tpu.vector_store %arg2[%c0_14, %c0_15], %54 {strides = array<i32>} : memref<16x128xf32, #tpu.memory_space<vmem>>, vector<16x128xf32>,
    return
  }
}

</mosaic_0001>

<llo_original>
// kernel: bn1d_filtered.1
$region0: #{bn1d_filtered.1}
  #allocation0 [shape = 'u32[]', space=smem, size = 0x4, offset = 0x4, fixed_abs, tag = 'smem constant byte address 0x4 - core index']
  #allocation1 [shape = 'u32[72,128]{1,0:T(1,128)}', space=vmem, size = 0x9000, scoped, tag = 'internal scratch']
  %s0 = inlined_call_operand.vmem [shape: f32[3], index: 0, kind: input, shape index: {}]
  %s1 = inlined_call_operand.vmem [shape: f32[16,128], index: 1, kind: input, shape index: {}]
  %s2 = inlined_call_operand.vmem [shape: f32[16,128], index: 2, kind: output, shape index: {}]
  %s3 = sld [smem:[#allocation0]]
  $region22: #{bn1d_filtered.1} parent=0
    _
  %s5 = ssub.s32 1, %s3
  %s6 = scalar_select 0, %s5, %s3
  $region1: #{bn1d_filtered.1} parent=0
    #allocation2 [shape = 'u8[512]{0}', space=smem, size = 0x200, scoped, tag = 'input window, operand 0, single buffered']
    #allocation3 [shape = 's32[1]{0}', space=sflag, size = 0x4, scoped, tag = 'scoped memory for bn1d_filtered.1']
    %7 = vsyncpa [#allocation3], 0
    // Predicated region
    $region2: #{bn1d_filtered.1} parent=1 // pred_check
      _
    $region3: #{bn1d_filtered.1} parent=1 // pred_check_branch
      %9 = sbr.rel (0) target = $region5
    $region4: #{bn1d_filtered.1} parent=1 // pred_region
      %11 = vsyncadd [#allocation3], 0
      %s13 = sshll.u32 %s0, 4
      %s14 = int_to_ptr.vmem [resolvable:$true] %s13
      %16 = dma.vmem_to_smem %s14, 16, [#allocation2], [#allocation3]
    $region5: #{bn1d_filtered.1} parent=1 // pred_fallthru
      _
    // Predicated region
    $region6: #{bn1d_filtered.1} parent=1 // pred_check
      _
    $region7: #{bn1d_filtered.1} parent=1 // pred_check_branch
      %18 = sbr.rel (0) target = $region9
    $region8: #{bn1d_filtered.1} parent=1 // pred_region
      _
    $region9: #{bn1d_filtered.1} parent=1 // pred_fallthru
      _
    // Predicated region
    $region10: #{bn1d_filtered.1} parent=1 // pred_check
      _
    $region11: #{bn1d_filtered.1} parent=1 // pred_check_branch
      %20 = sbr.rel (0) target = $region13
    $region12: #{bn1d_filtered.1} parent=1 // pred_region
      %22 = dma.done [#allocation3], 16
    $region13: #{bn1d_filtered.1} parent=1 // pred_fallthru
      _
    %23 = sfence
    %v24 = vld [vmem:[%s1] sm:$0xff]
    %v25 = vld [vmem:[%s1 + $0x8] sm:$0xff]
    %s26 = sld [smem:[#allocation2]]
    %s27 = sld [smem:[#allocation2 + $0x1]]
    %s28 = sld [smem:[#allocation2 + $0x2]]
    %v29 = vadd.f32 %v24, %v25
    %30 = vadd.xlane.f32.xlu0 %v29
    %v31 = vpop.xlane.xlu0 %30
    %v32 = vrot.slane %v31, 4
    %v33 = vadd.f32 %v31, %v32
    %v34 = vrot.slane %v33, 2
    %v35 = vadd.f32 %v33, %v34
    %v36 = vrot.slane %v35, 1
    %v37 = vadd.f32 %v35, %v36
    %s38 = vtos %v37
    %v39 = vrcp.pop 2048.0
    %v40 = vmul.f32 2048.0, %v39
    %v41 = vsub.f32 1.0, %v40
    %v42 = vmul.f32 %v39, %v41
    %v43 = vadd.f32 %v39, %v42
    %vm44 = vweird.f32 %v39
    %v45 = vsel %vm44, %v39, %v43
    %s46 = vtos %v45
    %s47 = smul.f32 %s38, %s46
    %v48 = vstv %s47
    %v49 = vsub.f32 %v24, %v48
    %v50 = vsub.f32 %v25, %v48
    %v51 = vmul.f32 %v49, %v49
    %v52 = vmul.f32 %v50, %v50
    %v53 = vadd.f32 %v51, %v52
    %54 = vadd.xlane.f32.xlu0 %v53
    %v55 = vpop.xlane.xlu0 %54
    %v56 = vrot.slane %v55, 4
    %v57 = vadd.f32 %v55, %v56
    %v58 = vrot.slane %v57, 2
    %v59 = vadd.f32 %v57, %v58
    %v60 = vrot.slane %v59, 1
    %v61 = vadd.f32 %v59, %v60
    %s62 = vtos %v61
    %v63 = vrcp.pop 2047.0
    %v64 = vmul.f32 2047.0, %v63
    %v65 = vsub.f32 1.0, %v64
    %v66 = vmul.f32 %v63, %v65
    %v67 = vadd.f32 %v63, %v66
    %vm68 = vweird.f32 %v63
    %v69 = vsel %vm68, %v63, %v67
    %s70 = vtos %v69
    %s71 = smul.f32 %s62, %s70
    %s72 = sadd.f32 %s71, 1e-10
    %v73 = vstv %s72
    %v74 = vrsqrt.pop %v73
    %v75 = vmul.f32 %v74, %v73
    %v76 = vmul.f32 %v75, %v74
    %v77 = vmul.f32 0.5, %v76
    %v78 = vsub.f32 1.5, %v77
    %v79 = vmul.f32 %v74, %v78
    %v80 = vmul.f32 %v73, %v79
    %vm81 = vcmp.eq.f32.partialorder %v73, inf
    %v82 = vsel %vm81, %v73, %v80
    %vm83 = vcmp.eq.f32.partialorder %v73, 0.0
    %v84 = vand.u32 %v73, 2147483648
    %v85 = vsel %vm83, %v84, %v82
    %s86 = vtos %v85
    %s87 = smul.f32 %s28, %s86
    %v88 = vand.u32 2147483647, %v49
    %v89 = vand.u32 2147483647, %v50
    %v90 = vstv %s87
    %vm91 = vcmp.lt.f32.partialorder %v88, %v90
    %vm92 = vcmp.lt.f32.partialorder %v89, %v90
    %v93 = vsel %vm91, 1, 0
    %v94 = vsel %vm92, 1, 0
    %v95 = vcvt.s32.f32 %v93
    %v96 = vcvt.s32.f32 %v94
    %v97 = vadd.f32 %v95, %v96
    %98 = vadd.xlane.f32.xlu0 %v97
    %v99 = vpop.xlane.xlu0 %98
    %v100 = vrot.slane %v99, 4
    %v101 = vadd.f32 %v99, %v100
    %v102 = vrot.slane %v101, 2
    %v103 = vadd.f32 %v101, %v102
    %v104 = vrot.slane %v103, 1
    %v105 = vadd.f32 %v103, %v104
    %s106 = vtos %v105
    %v107 = vsel %vm91, %v49, 0.0
    %v108 = vsel %vm92, %v50, 0.0
    %v109 = vadd.f32 %v107, %v108
    %110 = vadd.xlane.f32.xlu0 %v109
    %v111 = vpop.xlane.xlu0 %110
    %v112 = vrot.slane %v111, 4
    %v113 = vadd.f32 %v111, %v112
    %v114 = vrot.slane %v113, 2
    %v115 = vadd.f32 %v113, %v114
    %v116 = vrot.slane %v115, 1
    %v117 = vadd.f32 %v115, %v116
    %s118 = vtos %v117
    %v119 = vstv %s106
    %v120 = vrcp.pop %v119
    %v121 = vmul.f32 %v119, %v120
    %v122 = vsub.f32 1.0, %v121
    %v123 = vmul.f32 %v120, %v122
    %v124 = vadd.f32 %v120, %v123
    %vm125 = vweird.f32 %v119
    %vm126 = vweird.f32 %v120
    %vm127 = vmor %vm125, %vm126
    %v128 = vsel %vm127, %v120, %v124
    %v129 = vand.u32 2147483647, %v119
    %vm130 = vcmp.eq.f32.partialorder %v129, 8.507059e+37
    %v131 = vand.u32 %v119, 2147483648
    %v132 = vor.u32 1.1754944e-38, %v131
    %v133 = vsel %vm130, %v132, %v128
    %s134 = vtos %v133
    %s135 = smul.f32 %s118, %s134
    %v136 = vstv %s135
    %v137 = vsub.f32 %v49, %v136
    %v138 = vsub.f32 %v50, %v136
    %v139 = vmul.f32 %v137, %v137
    %v140 = vmul.f32 %v138, %v138
    %v141 = vsel %vm91, %v139, 0.0
    %v142 = vsel %vm92, %v140, 0.0
    %v143 = vadd.f32 %v141, %v142
    %144 = vadd.xlane.f32.xlu0 %v143
    %v145 = vpop.xlane.xlu0 %144
    %v146 = vrot.slane %v145, 4
    %v147 = vadd.f32 %v145, %v146
    %v148 = vrot.slane %v147, 2
    %v149 = vadd.f32 %v147, %v148
    %v150 = vrot.slane %v149, 1
    %v151 = vadd.f32 %v149, %v150
    %s152 = vtos %v151
    %s153 = ssub.f32 %s106, 1.0
    %v154 = vstv %s153
    %v155 = vrcp.pop %v154
    %v156 = vmul.f32 %v154, %v155
    %v157 = vsub.f32 1.0, %v156
    %v158 = vmul.f32 %v155, %v157
    %v159 = vadd.f32 %v155, %v158
    %vm160 = vweird.f32 %v154
    %vm161 = vweird.f32 %v155
    %vm162 = vmor %vm160, %vm161
    %v163 = vsel %vm162, %v155, %v159
    %v164 = vand.u32 2147483647, %v154
    %vm165 = vcmp.eq.f32.partialorder %v164, 8.507059e+37
    %v166 = vand.u32 %v154, 2147483648
    %v167 = vor.u32 1.1754944e-38, %v166
    %v168 = vsel %vm165, %v167, %v163
    %s169 = vtos %v168
    %s170 = smul.f32 %s152, %s169
    %s171 = sadd.f32 %s170, 1e-10
    %v172 = vstv %s171
    %v173 = vrsqrt.pop %v172
    %v174 = vmul.f32 %v173, %v172
    %v175 = vmul.f32 %v174, %v173
    %v176 = vmul.f32 0.5, %v175
    %v177 = vsub.f32 1.5, %v176
    %v178 = vmul.f32 %v173, %v177
    %vm179 = vweird.f32 %v172
    %vm180 = vweird.f32 %v173
    %vm181 = vmor %vm179, %vm180
    %v182 = vsel %vm181, %v173, %v178
    %s183 = vtos %v182
    %s184 = smul.f32 %s26, %s183
    %v185 = vstv %s184
    %v186 = vmul.f32 %v137, %v185
    %v187 = vmul.f32 %v138, %v185
    %v188 = vstv %s27
    %v189 = vadd.f32 %v186, %v188
    %v190 = vadd.f32 %v187, %v188
    %191 = vst [vmem:[%s2] sm:$0xff] %v189
    %192 = vst [vmem:[%s2 + $0x8] sm:$0xff] %v190
    // Predicated region
    $region14: #{bn1d_filtered.1} parent=1 // pred_check
      _
    $region15: #{bn1d_filtered.1} parent=1 // pred_check_branch
      %194 = sbr.rel (0) target = $region17
    $region16: #{bn1d_filtered.1} parent=1 // pred_region
      _
    $region17: #{bn1d_filtered.1} parent=1 // pred_fallthru
      _
    // Predicated region
    $region18: #{bn1d_filtered.1} parent=1 // pred_check
      _
    $region19: #{bn1d_filtered.1} parent=1 // pred_check_branch
      %196 = sbr.rel (0) target = $region21
    $region20: #{bn1d_filtered.1} parent=1 // pred_region
      _
    $region21: #{bn1d_filtered.1} parent=1 // pred_fallthru
      _
    %197 = vsyncpa [#allocation3], 1

</llo_original>
